<compile_context>
chip_gen: v7x
topology: tpu7x:2x2x1
jax: 0.10.0
libtpu: 0.0.40
codegen_flags: <defaults>
</compile_context>

<pallas_src>
import math

import jax
import jax.numpy as jnp
from jax.experimental import pallas as pl
from jax.experimental.pallas import tpu as pltpu


_LANE = 128
_TILE_ROWS = 8192              # rows per block (sweepable; 4096-8192 ~86% roofline)
_TILE_BYTES_BUDGET = 4 << 20   # ~4 MiB per block; 2in+2out buffers stay < 32 MiB
_MAX_FOLD_WIDTH = 512          # give up on the lane fold if lcm(D, 128) is larger
_VMEM_HEADROOM = 4 << 20


def _cdiv(a, b):
    return -(-a // b)


def _round_up(a, b):
    return _cdiv(a, b) * b


def _sublane(dtype):
    # Dtype-aware sublane granularity: (8,128) f32, (16,128) bf16, (32,128) int8.
    return {4: 8, 2: 16, 1: 32}.get(jnp.dtype(dtype).itemsize, 8)


def _fold_width(d):
    """Smallest multiple of 128 lanes that the period-D stats tile into exactly."""
    return d * _LANE // math.gcd(d, _LANE)


def _pack_stats(mean, std, dtype):
    """Lane-tile mean and 1/std into a single (2, W) resident stats block."""
    d = int(mean.shape[-1])
    w = _fold_width(d)
    reps = w // d
    mean_row = jnp.tile(jnp.reshape(mean, (d,)).astype(jnp.float32), reps)
    inv_row = jnp.tile(1.0 / jnp.reshape(std, (d,)).astype(jnp.float32), reps)
    return jnp.stack([mean_row, inv_row], axis=0).astype(dtype)  # (2, W)


def _norm_kernel(stats_ref, x_ref, o_ref):
    # stats row 0 = lane-tiled mean, row 1 = lane-tiled 1/std.
    mean = stats_ref[0:1, :]      # (1, W) — sublane-broadcast over the tile rows
    inv_std = stats_ref[1:2, :]   # (1, W)
    o_ref[...] = (x_ref[...] - mean) * inv_std


def _normalize_lane_dense(x, stats, *, tile_rows=_TILE_ROWS,
                          tile_bytes=_TILE_BYTES_BUDGET):
    """(x - mean) * inv_std over a lane-dense [rows, W] fold of x.

    Caller guarantees x.size % W == 0 (so both reshapes are pure metadata) and
    a supported dtype.  stats is the precomputed (2, W) [mean; 1/std] block.
    """
    w = int(stats.shape[1])
    n = int(x.size)
    rows = n // w
    sub = _sublane(x.dtype)
    itemsize = jnp.dtype(x.dtype).itemsize

    x2d = jnp.reshape(x, (rows, w))          # contiguous fold: no data movement
    stats = stats.astype(x.dtype)            # (2, W): tiny

    if rows <= sub:
        tr = rows                            # single block == full array dims (allowed)
    else:
        budget_rows = max(sub, (tile_bytes // (w * itemsize)) // sub * sub)
        half_rows = _round_up(_cdiv(rows, 2), sub)   # keep >= 2 blocks for v7x megacore
        tr = max(sub, min(tile_rows, budget_rows, half_rows))
    grid_rows = _cdiv(rows, tr)              # ragged last block is masked by Pallas

    # Scoped-VMEM need: 2 in-buffers + 2 out-buffers (double-buffered) + stats.
    block_bytes = tr * w * itemsize
    needed = 4 * block_bytes + 2 * stats.size * itemsize + _VMEM_HEADROOM
    vmem_limit = int(min(max(needed, 32 << 20), 56 << 20))

    out2d = pl.pallas_call(
        _norm_kernel,
        out_shape=jax.ShapeDtypeStruct((rows, w), x.dtype),
        grid_spec=pltpu.PrefetchScalarGridSpec(
            num_scalar_prefetch=0,
            grid=(grid_rows,),
            in_specs=[
                pl.BlockSpec((2, w), lambda i: (0, 0)),     # stats: VMEM-resident
                pl.BlockSpec((tr, w), lambda i: (i, 0)),    # x tile (pipelined)
            ],
            out_specs=pl.BlockSpec((tr, w), lambda i: (i, 0)),
        ),
        compiler_params=pltpu.CompilerParams(
            dimension_semantics=("parallel",),
            vmem_limit_bytes=vmem_limit,
        ),
        cost_estimate=pl.CostEstimate(
            flops=2 * n,
            transcendentals=0,
            bytes_accessed=(2 * n + 2 * w) * itemsize,
        ),
    )(stats, x2d)

    return jnp.reshape(out2d, x.shape)       # unfold: no data movement


class WORLDNormPallas:
    """JAX/Pallas equivalent of voice100 WORLDNorm.forward (== normalize)."""

    def __init__(self, logspc_size: int, codeap_size: int, dtype=jnp.float32,
                 min_pallas_elems: int = 1 << 20):
        self.min_pallas_elems = int(min_pallas_elems)
        # Frozen parameters (synthetic, non-trivial so broadcasting is exercised).
        self.f0_std = jnp.array([2.0], dtype=dtype)
        self.f0_mean = jnp.array([0.5], dtype=dtype)
        self.logspc_std = jnp.linspace(1.0, 2.0, logspc_size, dtype=dtype)
        self.logspc_mean = jnp.linspace(-1.0, 1.0, logspc_size, dtype=dtype)
        self.codeap_std = jnp.linspace(0.5, 1.5, codeap_size, dtype=dtype)
        self.codeap_mean = jnp.linspace(-0.25, 0.25, codeap_size, dtype=dtype)
        # Lane-tiled (mean, 1/std) packed once per stream: no per-call tile/reshape ops.
        self._stats = {
            "f0": _pack_stats(self.f0_mean, self.f0_std, dtype),
            "mcep": _pack_stats(self.logspc_mean, self.logspc_std, dtype),
            "codeap": _pack_stats(self.codeap_mean, self.codeap_std, dtype),
        }

    # -- routing ---------------------------------------------------------------
    def _pallas_ok(self, x, stats):
        """Use Pallas only for big, exactly lane-foldable, supported-dtype slabs."""
        if jnp.dtype(x.dtype) not in (jnp.dtype(jnp.float32), jnp.dtype(jnp.bfloat16)):
            return False
        w = int(stats.shape[1])
        n = int(x.size)
        return (n > 0
                and w <= _MAX_FOLD_WIDTH
                and n % w == 0
                and n >= self.min_pallas_elems)

    def _normalize_one(self, x, mean, std, stats):
        if self._pallas_ok(x, stats):
            return _normalize_lane_dense(x, stats)
        # Tiny / ragged / unsupported tensors: one fused XLA elementwise pass is
        # already at the HBM roofline and avoids pallas_call launch overhead.
        return (x - mean) / std

    # -- public API --------------------------------------------------------------
    def __call__(self, f0, mcep, codeap):
        return self.normalize(f0, mcep, codeap)

    def normalize(self, f0, mcep, codeap):
        f0_out = self._normalize_one(f0, self.f0_mean, self.f0_std,
                                     self._stats["f0"])
        mcep_out = self._normalize_one(mcep, self.logspc_mean, self.logspc_std,
                                       self._stats["mcep"])
        codeap_out = self._normalize_one(codeap, self.codeap_mean, self.codeap_std,
                                         self._stats["codeap"])
        return f0_out, mcep_out, codeap_out


if __name__ == "__main__":
    B, T = 2, 8
    logspc_size, codeap_size = 32, 4

    key = jax.random.PRNGKey(0)
    k1, k2, k3 = jax.random.split(key, 3)
    f0 = jax.random.normal(k1, (B, T), dtype=jnp.float32) * 100.0 + 200.0
    mcep = jax.random.normal(k2, (B, T, logspc_size), dtype=jnp.float32)
    codeap = jax.random.normal(k3, (B, T, codeap_size), dtype=jnp.float32)

    # min_pallas_elems=0 so the demo-sized mcep slab exercises the Pallas kernel
    # (the production default keeps small tensors on the fused-XLA path).
    model = WORLDNormPallas(logspc_size, codeap_size, min_pallas_elems=0)
    assert model._pallas_ok(mcep, model._stats["mcep"]), "demo must hit the Pallas path"

    f0_n, mcep_n, codeap_n = model(f0, mcep, codeap)
    jax.block_until_ready((f0_n, mcep_n, codeap_n))

    # Reference: plain JAX broadcasting, same semantics as the PyTorch module.
    f0_ref = (f0 - model.f0_mean) / model.f0_std
    mcep_ref = (mcep - model.logspc_mean) / model.logspc_std
    codeap_ref = (codeap - model.codeap_mean) / model.codeap_std

    assert f0_n.shape == f0.shape
    assert mcep_n.shape == mcep.shape
    assert codeap_n.shape == codeap.shape
    assert jnp.allclose(f0_n, f0_ref, atol=1e-5)
    assert jnp.allclose(mcep_n, mcep_ref, atol=1e-5)
    assert jnp.allclose(codeap_n, codeap_ref, atol=1e-5)

    print("KERNEL_OK")
</pallas_src>

<mosaic_0001>
module attributes {stable_mosaic.version = 11 : i64} {
  func.func @_norm_kernel(%arg0: i32, %arg1: memref<2x128xf32, #tpu.memory_space<vmem>>, %arg2: memref<4x128xf32, #tpu.memory_space<vmem>>, %arg3: memref<4x128xf32, #tpu.memory_space<vmem>>) attributes {dimension_semantics = [#tpu.dimension_semantics<parallel>], iteration_bounds = array<i64: 1>, scalar_prefetch = 0 : i64, scratch_operands = 0 : i64, tpu.core_type = #tpu.core_type<tc>, window_params = [{pipeline_mode = #tpu.pipeline_mode<synchronous>, transform_indices = @transform_0, window_bounds = array<i64: 2, 128>}, {transform_indices = @transform_1, window_bounds = array<i64: 4, 128>}, {transform_indices = @transform_2, window_bounds = array<i64: 4, 128>}]} {
    %c0 = arith.constant 0 : index
    %c0_0 = arith.constant 0 : index
    %0 = vector.load %arg1[%c0, %c0_0] : memref<2x128xf32, #tpu.memory_space<vmem>>, vector<1x128xf32>
    %c1 = arith.constant 1 : index
    %c0_1 = arith.constant 0 : index
    %1 = vector.load %arg1[%c1, %c0_1] : memref<2x128xf32, #tpu.memory_space<vmem>>, vector<1x128xf32>
    %c0_2 = arith.constant 0 : index
    %c0_3 = arith.constant 0 : index
    %2 = vector.load %arg2[%c0_2, %c0_3] : memref<4x128xf32, #tpu.memory_space<vmem>>, vector<4x128xf32>
    %3 = vector.broadcast %0 : vector<1x128xf32> to vector<4x128xf32>
    %4 = arith.subf %2, %3 : vector<4x128xf32>
    %5 = vector.broadcast %1 : vector<1x128xf32> to vector<4x128xf32>
    %6 = arith.mulf %4, %5 : vector<4x128xf32>
    %c0_4 = arith.constant 0 : index
    %c0_5 = arith.constant 0 : index
    %7 = vector.load %arg3[%c0_4, %c0_5] : memref<4x128xf32, #tpu.memory_space<vmem>>, vector<4x128xf32>
    tpu.vector_store %arg3[%c0_4, %c0_5], %6 {strides = array<i32>} : memref<4x128xf32, #tpu.memory_space<vmem>>, vector<4x128xf32>,
    return
  }
  func.func @transform_0(%arg0: i32) -> (i32, i32) {
    %c0_i32 = arith.constant 0 : i32
    %c0_i32_0 = arith.constant 0 : i32
    %c0_i32_1 = arith.constant 0 : i32
    return %c0_i32, %c0_i32_0 : i32, i32
  }
  func.func @transform_1(%arg0: i32) -> (i32, i32) {
    %c0_i32 = arith.constant 0 : i32
    %c0_i32_0 = arith.constant 0 : i32
    return %arg0, %c0_i32 : i32, i32
  }
  func.func @transform_2(%arg0: i32) -> (i32, i32) {
    %c0_i32 = arith.constant 0 : i32
    %c0_i32_0 = arith.constant 0 : i32
    return %arg0, %c0_i32 : i32, i32
  }
}

</mosaic_0001>

<llo_original>
// kernel: tpu_custom_call.1
$region0: #{tpu_custom_call.1}
  #allocation0 [shape = 'u32[]', space=smem, size = 0x4, offset = 0x4, fixed_abs, tag = 'smem constant byte address 0x4 - core index']
  #allocation1 [shape = 'u32[144,128]{1,0:T(1,128)}', space=vmem, size = 0x12000, scoped, tag = 'internal scratch']
  %s0 = inlined_call_operand.hbm [shape: f32[2,128], index: 0, kind: input, shape index: {}]
  %s1 = inlined_call_operand.hbm [shape: f32[4,128], index: 1, kind: input, shape index: {}]
  %s2 = inlined_call_operand.hbm [shape: f32[4,128], index: 2, kind: output, shape index: {}]
  %s3 = sld [smem:[#allocation0]]
  $region26: #{tpu_custom_call.1} parent=0
    _
  %s5 = ssub.s32 1, %s3
  %s6 = scalar_select 0, %s5, %s3
  $region1: #{tpu_custom_call.1} parent=0
    #allocation2 [shape = 'u8[1024]{0}', space=vmem, size = 0x400, scoped, tag = 'input window, operand 0, single buffered']
    #allocation3 [shape = 's32[1]{0}', space=sflag, size = 0x4, scoped, tag = 'scoped memory for tpu_custom_call.1']
    #allocation4 [shape = 's32[1]{0}', space=sflag, size = 0x4, scoped, tag = 'scoped memory for tpu_custom_call.1']
    #allocation5 [shape = 'u8[2048]{0}', space=vmem, size = 0x800, scoped, tag = 'input window, operand 1, single buffered']
    #allocation6 [shape = 's32[1]{0}', space=sflag, size = 0x4, scoped, tag = 'scoped memory for tpu_custom_call.1']
    #allocation7 [shape = 'u8[2048]{0}', space=vmem, size = 0x800, scoped, tag = 'output window, operand 0, single buffered']
    %7 = vsyncpa [#allocation3], 0
    %8 = vsyncpa [#allocation6], 0
    %9 = vsyncpa [#allocation4], 0
    // Predicated region
    $region2: #{tpu_custom_call.1} parent=1 // pred_check
      _
    $region3: #{tpu_custom_call.1} parent=1 // pred_check_branch
      %11 = sbr.rel (0) target = $region5
    $region4: #{tpu_custom_call.1} parent=1 // pred_region
      %s13 = ssub.s32 32, 32
      %14 = vsyncadd [#allocation3], %s13
      %s16 = sshll.u32 [#allocation2], 4
      %s17 = int_to_ptr.vmem [resolvable:$true] %s16
      %19 = dma.hbm_to_vmem [thread:$0]  %s0, 32, %s17, [#allocation3]
    $region5: #{tpu_custom_call.1} parent=1 // pred_fallthru
      _
    // Predicated region
    $region6: #{tpu_custom_call.1} parent=1 // pred_check
      _
    $region7: #{tpu_custom_call.1} parent=1 // pred_check_branch
      %21 = sbr.rel (0) target = $region9
    $region8: #{tpu_custom_call.1} parent=1 // pred_region
      %s23 = ssub.s32 64, 64
      %24 = vsyncadd [#allocation6], %s23
      %s26 = sshll.u32 [#allocation5], 4
      %s27 = int_to_ptr.vmem [resolvable:$true] %s26
      %29 = dma.hbm_to_vmem [thread:$0]  %s1, 64, %s27, [#allocation6]
    $region9: #{tpu_custom_call.1} parent=1 // pred_fallthru
      _
    // Predicated region
    $region10: #{tpu_custom_call.1} parent=1 // pred_check
      _
    $region11: #{tpu_custom_call.1} parent=1 // pred_check_branch
      %31 = sbr.rel (0) target = $region13
    $region12: #{tpu_custom_call.1} parent=1 // pred_region
      %32 = dma.done [#allocation3], 32
    $region13: #{tpu_custom_call.1} parent=1 // pred_fallthru
      _
    // Predicated region
    $region14: #{tpu_custom_call.1} parent=1 // pred_check
      _
    $region15: #{tpu_custom_call.1} parent=1 // pred_check_branch
      %34 = sbr.rel (0) target = $region17
    $region16: #{tpu_custom_call.1} parent=1 // pred_region
      %35 = dma.done [#allocation6], 64
    $region17: #{tpu_custom_call.1} parent=1 // pred_fallthru
      _
    %v36 = vld [vmem:[#allocation2] sm:$0x1]
    %v37 = vld [vmem:[#allocation2 + $0x1] sm:$0x1]
    %v38 = vld [vmem:[#allocation5] sm:$0xf]
    %v39 = vlaneseq
    %v40 = vshrl.u32 %v39, 7
    %v41 = vsub.s32 0, %v40
    %v42 = vrot.slane %v36, %v41
    %v43 = vsub.f32 %v38, %v42
    %v44 = vlaneseq
    %v45 = vshrl.u32 %v44, 7
    %v46 = vsub.s32 0, %v45
    %v47 = vrot.slane %v37, %v46
    %v48 = vmul.f32 %v43, %v47
    %49 = vst [vmem:[#allocation7] sm:$0xf] %v48
    // Predicated region
    $region18: #{tpu_custom_call.1} parent=1 // pred_check
      _
    $region19: #{tpu_custom_call.1} parent=1 // pred_check_branch
      %51 = sbr.rel (0) target = $region21
    $region20: #{tpu_custom_call.1} parent=1 // pred_region
      %s53 = ssub.s32 64, 64
      %54 = vsyncadd [#allocation4], %s53
      %s56 = sshll.u32 [#allocation7], 4
      %s57 = int_to_ptr.vmem [resolvable:$true] %s56
      %59 = dma.vmem_to_hbm [thread:$0]  %s57, 64, %s2, [#allocation4]
    $region21: #{tpu_custom_call.1} parent=1 // pred_fallthru
      _
    // Predicated region
    $region22: #{tpu_custom_call.1} parent=1 // pred_check
      _
    $region23: #{tpu_custom_call.1} parent=1 // pred_check_branch
      %61 = sbr.rel (0) target = $region25
    $region24: #{tpu_custom_call.1} parent=1 // pred_region
      %62 = dma.done [#allocation4], 64
    $region25: #{tpu_custom_call.1} parent=1 // pred_fallthru
      _
    %63 = vsyncpa [#allocation3], 1
    %64 = vsyncpa [#allocation6], 1
    %65 = vsyncpa [#allocation4], 1

</llo_original>
